<compile_context>
chip_gen: v7x
topology: tpu7x:2x2x1
jax: 0.10.0
libtpu: 0.0.40
codegen_flags: <defaults>
</compile_context>

<pallas_src>
import functools

import jax
import jax.numpy as jnp
from jax.experimental import pallas as pl
from jax.experimental.pallas import tpu as pltpu


# ----------------------------------------------------------------------------
# Kernels
# ----------------------------------------------------------------------------
def _ln_kernel(x_ref, a_ref, b_ref, o_ref, *, eps, d):
    """PyTorch-style LayerNorm over the last dim of a (TR, D) row tile.

    NOTE: boundary (partial) blocks may contain undefined padding rows; those
    rows compute garbage (possibly inf/NaN) but are never written back, and
    rows are independent, so this is safe — do not "fix" by padding upstream.
    """
    x = x_ref[...].astype(jnp.float32)                       # (TR, D)
    a = a_ref[...]                                           # (1, D) f32
    b = b_ref[...]                                           # (1, D) f32

    mean = jnp.sum(x, axis=-1, keepdims=True) * jnp.float32(1.0 / d)
    diff = x - mean
    # Unbiased variance (matches torch.Tensor.std default, divisor D-1).
    var = jnp.sum(diff * diff, axis=-1, keepdims=True) * jnp.float32(1.0 / (d - 1))
    # Reciprocal on the small (TR, 1) vector, broadcast as a multiply.
    inv = 1.0 / (jnp.sqrt(var) + jnp.float32(eps))
    o_ref[...] = (diff * inv * a + b).astype(o_ref.dtype)


def _ln_folded_kernel(x_ref, a_ref, b_ref, seg_ref, segt_ref, o_ref, *, eps, d):
    """Lane-dense path for small D: each kernel row packs k = W // d logical
    rows side by side (W a multiple of 128).  Per-segment reductions and
    broadcasts are tiny matmuls against a one-hot segment matrix, so all
    tiles stay lane-aligned (no in-kernel relayout, no masked stores)."""
    x = x_ref[...].astype(jnp.float32)                       # (TR, W)
    a = a_ref[...]                                           # (1, W) f32 (a_2 tiled)
    b = b_ref[...]                                           # (1, W) f32 (b_2 tiled)
    seg = seg_ref[...]                                       # (W, k) one-hot
    segt = segt_ref[...]                                     # (k, W)

    s1 = jnp.dot(x, seg, preferred_element_type=jnp.float32)          # (TR, k)
    mean = s1 * jnp.float32(1.0 / d)
    diff = x - jnp.dot(mean, segt, preferred_element_type=jnp.float32)  # (TR, W)
    s2 = jnp.dot(diff * diff, seg, preferred_element_type=jnp.float32)  # (TR, k)
    var = s2 * jnp.float32(1.0 / (d - 1))
    inv = 1.0 / (jnp.sqrt(var) + jnp.float32(eps))                      # (TR, k)
    inv_b = jnp.dot(inv, segt, preferred_element_type=jnp.float32)      # (TR, W)
    o_ref[...] = (diff * inv_b * a + b).astype(o_ref.dtype)


# ----------------------------------------------------------------------------
# Tiling helpers
# ----------------------------------------------------------------------------
def _sublane_multiple(itemsize):
    # f32 -> 8, bf16 -> 16, int8/fp8 -> 32 (sub-32-bit packs along sublanes).
    return 8 * max(1, 4 // max(int(itemsize), 1))


def _choose_row_tile(n_rows, width, itemsize):
    sub = _sublane_multiple(itemsize)
    bytes_per_row = max(width * itemsize, 1)
    # ~3 MiB per buffer; in+out double-buffered => ~12 MiB live VMEM.
    # Safe on v7x (64 MiB/TC) and leaves lots of headroom on v5e/v6e (128 MiB).
    tr = (3 * 1024 * 1024) // bytes_per_row
    # Ensure >= ~4 grid steps when rows allow: v7x has 2 TensorCores per chip
    # (a grid of 1 idles one) and the pipeline needs steps to overlap DMA.
    if n_rows >= 4 * sub:
        tr = min(tr, n_rows // 4)
    elif n_rows >= 2 * sub:
        tr = min(tr, n_rows // 2)
    tr = max(sub, (tr // sub) * sub)
    if tr >= n_rows:
        tr = n_rows  # one block covering the whole row dim (full-dim block is legal)
    return tr


# ----------------------------------------------------------------------------
# Wrapper
# ----------------------------------------------------------------------------
def pallas_layer_norm(x, a_2, b_2, eps=1e-6):
    """PyTorch-semantics LayerNorm over the last dim of x (..., D)."""
    orig_shape = x.shape
    D = orig_shape[-1]
    itemsize = jnp.dtype(x.dtype).itemsize
    x2 = x.reshape(-1, D)                       # free row-major reshape
    R = x2.shape[0]

    a32 = a_2.reshape(-1).astype(jnp.float32)
    b32 = b_2.reshape(-1).astype(jnp.float32)

    # Lane-dense folding for small feature dims: pack k = 128 // D logical
    # rows per kernel row so the block's last dim is a multiple of 128
    # (full vreg lanes, unmasked stores).
    k = 1
    if 1 < D < 128 and 128 % D == 0 and R % (128 // D) == 0:
        k = 128 // D
    W = k * D
    rows = R // k

    TR = _choose_row_tile(rows, W, itemsize)
    grid = (pl.cdiv(rows, TR),)

    tile_bytes = TR * W * itemsize
    vmem_limit = int(min(48 * 1024 * 1024,
                         max(32 * 1024 * 1024, 4 * tile_bytes + 4 * 1024 * 1024)))
    compiler_params = pltpu.CompilerParams(
        dimension_semantics=("parallel",),
        vmem_limit_bytes=vmem_limit,
    )

    out_shape = jax.ShapeDtypeStruct((rows, W), x.dtype)
    row_spec = pl.BlockSpec((TR, W), lambda i: (i, 0))
    vec_spec = pl.BlockSpec((1, W), lambda i: (0, 0))

    if k == 1:
        kernel = functools.partial(_ln_kernel, eps=eps, d=D)
        out = pl.pallas_call(
            kernel,
            out_shape=out_shape,
            grid=grid,
            in_specs=[row_spec, vec_spec, vec_spec],
            out_specs=row_spec,
            compiler_params=compiler_params,
        )(x2, a32.reshape(1, D), b32.reshape(1, D))
    else:
        xw = x2.reshape(rows, W)                # free row-major reshape
        aw = jnp.tile(a32, k).reshape(1, W)
        bw = jnp.tile(b32, k).reshape(1, W)
        lane_seg = jnp.arange(W, dtype=jnp.int32) // D
        seg = (lane_seg[:, None] == jnp.arange(k, dtype=jnp.int32)[None, :]
               ).astype(jnp.float32)            # (W, k) one-hot segment matrix
        segt = jnp.transpose(seg)               # (k, W)
        kernel = functools.partial(_ln_folded_kernel, eps=eps, d=D)
        out = pl.pallas_call(
            kernel,
            out_shape=out_shape,
            grid=grid,
            in_specs=[
                row_spec, vec_spec, vec_spec,
                pl.BlockSpec((W, k), lambda i: (0, 0)),
                pl.BlockSpec((k, W), lambda i: (0, 0)),
            ],
            out_specs=row_spec,
            compiler_params=compiler_params,
        )(xw, aw, bw, seg, segt)

    return out.reshape(orig_shape)


class Encoder:
    """Core encoder: a stack of N nets followed by LayerNorm (Pallas)."""

    def __init__(self, layer_fns, features, eps=1e-6):
        # layer_fns: list of callables layer(x, mask) -> x
        self.layer_fns = layer_fns
        # LayerNorm params, deterministic init (matches nn.Parameter init).
        self.a_2 = jnp.ones((features,), dtype=jnp.float32)
        self.b_2 = jnp.zeros((features,), dtype=jnp.float32)
        self.eps = eps

    def __call__(self, x, mask):
        for layer in self.layer_fns:
            x = layer(x, mask)
        return pallas_layer_norm(x, self.a_2, self.b_2, self.eps)


if __name__ == "__main__":
    key = jax.random.PRNGKey(0)
    k_x, _ = jax.random.split(key)

    # Small shapes: batch=2, seq=8, hidden(features)=32, N=2 layers.
    B, S, D = 2, 8, 32
    N = 2

    x = jax.random.normal(k_x, (B, S, D), dtype=jnp.float32)
    mask = jnp.ones((B, 1, S), dtype=jnp.float32)

    # TODO(synk): the RAT EncoderLayer body is not included in the provided
    # source; the cloned layers are treated as opaque callables (identity
    # stand-ins here) so only Encoder's own compute (final LayerNorm) is
    # realized in the Pallas kernel.
    def opaque_layer(x, mask):
        return x

    encoder = Encoder([opaque_layer] * N, features=D, eps=1e-6)

    out = encoder(x, mask)
    out = jax.block_until_ready(out)

    # Sanity check against a pure-JAX reference of the PyTorch math.
    mean = jnp.mean(x, axis=-1, keepdims=True)
    diff = x - mean
    std = jnp.sqrt(jnp.sum(diff * diff, axis=-1, keepdims=True) / (D - 1))
    ref = encoder.a_2 * diff / (std + 1e-6) + encoder.b_2
    assert out.shape == ref.shape, "shape mismatch vs reference"
    assert jnp.allclose(out, ref, atol=1e-5, rtol=1e-5), "mismatch vs reference"

    print("KERNEL_OK")
</pallas_src>

<mosaic_0001>
module attributes {stable_mosaic.version = 11 : i64} {
  func.func @_ln_folded_kernel(%arg0: i32, %arg1: memref<4x128xf32, #tpu.memory_space<vmem>>, %arg2: memref<1x128xf32, #tpu.memory_space<vmem>>, %arg3: memref<1x128xf32, #tpu.memory_space<vmem>>, %arg4: memref<128x4xf32, #tpu.memory_space<vmem>>, %arg5: memref<4x128xf32, #tpu.memory_space<vmem>>, %arg6: memref<4x128xf32, #tpu.memory_space<vmem>>) attributes {dimension_semantics = [#tpu.dimension_semantics<parallel>], iteration_bounds = array<i64: 1>, scalar_prefetch = 0 : i64, scratch_operands = 0 : i64, tpu.core_type = #tpu.core_type<tc>, window_params = [{transform_indices = @transform_0, window_bounds = array<i64: 4, 128>}, {pipeline_mode = #tpu.pipeline_mode<synchronous>, transform_indices = @transform_1, window_bounds = array<i64: 1, 128>}, {pipeline_mode = #tpu.pipeline_mode<synchronous>, transform_indices = @transform_2, window_bounds = array<i64: 1, 128>}, {pipeline_mode = #tpu.pipeline_mode<synchronous>, transform_indices = @transform_3, window_bounds = array<i64: 128, 4>}, {pipeline_mode = #tpu.pipeline_mode<synchronous>, transform_indices = @transform_4, window_bounds = array<i64: 4, 128>}, {transform_indices = @transform_5, window_bounds = array<i64: 4, 128>}]} {
    %c0 = arith.constant 0 : index
    %c0_0 = arith.constant 0 : index
    %0 = vector.load %arg1[%c0, %c0_0] : memref<4x128xf32, #tpu.memory_space<vmem>>, vector<4x128xf32>
    %c0_1 = arith.constant 0 : index
    %c0_2 = arith.constant 0 : index
    %1 = vector.load %arg2[%c0_1, %c0_2] : memref<1x128xf32, #tpu.memory_space<vmem>>, vector<1x128xf32>
    %c0_3 = arith.constant 0 : index
    %c0_4 = arith.constant 0 : index
    %2 = vector.load %arg3[%c0_3, %c0_4] : memref<1x128xf32, #tpu.memory_space<vmem>>, vector<1x128xf32>
    %c0_5 = arith.constant 0 : index
    %c0_6 = arith.constant 0 : index
    %3 = vector.load %arg4[%c0_5, %c0_6] : memref<128x4xf32, #tpu.memory_space<vmem>>, vector<128x4xf32>
    %c0_7 = arith.constant 0 : index
    %c0_8 = arith.constant 0 : index
    %4 = vector.load %arg5[%c0_7, %c0_8] : memref<4x128xf32, #tpu.memory_space<vmem>>, vector<4x128xf32>
    %cst = arith.constant dense<0.000000e+00> : vector<4x4xf32>
    %5 = tpu.matmul %0, %3, %cst {dimension_numbers = #tpu.dot_dimension_numbers<[1], [0], [0], [1], [0, 0, 1, 1], [], []>} : vector<4x128xf32>, vector<128x4xf32>, vector<4x4xf32> -> vector<4x4xf32>
    %cst_9 = arith.constant 3.125000e-02 : f32
    %6 = vector.broadcast %cst_9 : f32 to vector<4x4xf32>
    %7 = arith.mulf %5, %6 : vector<4x4xf32>
    %cst_10 = arith.constant dense<0.000000e+00> : vector<4x128xf32>
    %8 = tpu.matmul %7, %4, %cst_10 {dimension_numbers = #tpu.dot_dimension_numbers<[1], [0], [0], [1], [0, 0, 1, 1], [], []>} : vector<4x4xf32>, vector<4x128xf32>, vector<4x128xf32> -> vector<4x128xf32>
    %9 = arith.subf %0, %8 : vector<4x128xf32>
    %10 = arith.mulf %9, %9 : vector<4x128xf32>
    %cst_11 = arith.constant dense<0.000000e+00> : vector<4x4xf32>
    %11 = tpu.matmul %10, %3, %cst_11 {dimension_numbers = #tpu.dot_dimension_numbers<[1], [0], [0], [1], [0, 0, 1, 1], [], []>} : vector<4x128xf32>, vector<128x4xf32>, vector<4x4xf32> -> vector<4x4xf32>
    %cst_12 = arith.constant 0.0322580636 : f32
    %12 = vector.broadcast %cst_12 : f32 to vector<4x4xf32>
    %13 = arith.mulf %11, %12 : vector<4x4xf32>
    %14 = math.sqrt %13 : vector<4x4xf32>
    %cst_13 = arith.constant 9.99999997E-7 : f32
    %15 = vector.broadcast %cst_13 : f32 to vector<4x4xf32>
    %16 = arith.addf %14, %15 : vector<4x4xf32>
    %cst_14 = arith.constant 1.000000e+00 : f32
    %17 = vector.broadcast %cst_14 : f32 to vector<4x4xf32>
    %18 = arith.divf %17, %16 : vector<4x4xf32>
    %cst_15 = arith.constant dense<0.000000e+00> : vector<4x128xf32>
    %19 = tpu.matmul %18, %4, %cst_15 {dimension_numbers = #tpu.dot_dimension_numbers<[1], [0], [0], [1], [0, 0, 1, 1], [], []>} : vector<4x4xf32>, vector<4x128xf32>, vector<4x128xf32> -> vector<4x128xf32>
    %20 = arith.mulf %9, %19 : vector<4x128xf32>
    %21 = vector.broadcast %1 : vector<1x128xf32> to vector<4x128xf32>
    %22 = arith.mulf %20, %21 : vector<4x128xf32>
    %23 = vector.broadcast %2 : vector<1x128xf32> to vector<4x128xf32>
    %24 = arith.addf %22, %23 : vector<4x128xf32>
    %c0_16 = arith.constant 0 : index
    %c0_17 = arith.constant 0 : index
    %25 = vector.load %arg6[%c0_16, %c0_17] : memref<4x128xf32, #tpu.memory_space<vmem>>, vector<4x128xf32>
    tpu.vector_store %arg6[%c0_16, %c0_17], %24 {strides = array<i32>} : memref<4x128xf32, #tpu.memory_space<vmem>>, vector<4x128xf32>,
    return
  }
  func.func @transform_0(%arg0: i32) -> (i32, i32) {
    %c0_i32 = arith.constant 0 : i32
    %c0_i32_0 = arith.constant 0 : i32
    return %arg0, %c0_i32 : i32, i32
  }
  func.func @transform_1(%arg0: i32) -> (i32, i32) {
    %c0_i32 = arith.constant 0 : i32
    %c0_i32_0 = arith.constant 0 : i32
    %c0_i32_1 = arith.constant 0 : i32
    return %c0_i32, %c0_i32_0 : i32, i32
  }
  func.func @transform_2(%arg0: i32) -> (i32, i32) {
    %c0_i32 = arith.constant 0 : i32
    %c0_i32_0 = arith.constant 0 : i32
    %c0_i32_1 = arith.constant 0 : i32
    return %c0_i32, %c0_i32_0 : i32, i32
  }
  func.func @transform_3(%arg0: i32) -> (i32, i32) {
    %c0_i32 = arith.constant 0 : i32
    %c0_i32_0 = arith.constant 0 : i32
    %c0_i32_1 = arith.constant 0 : i32
    return %c0_i32, %c0_i32_0 : i32, i32
  }
  func.func @transform_4(%arg0: i32) -> (i32, i32) {
    %c0_i32 = arith.constant 0 : i32
    %c0_i32_0 = arith.constant 0 : i32
    %c0_i32_1 = arith.constant 0 : i32
    return %c0_i32, %c0_i32_0 : i32, i32
  }
  func.func @transform_5(%arg0: i32) -> (i32, i32) {
    %c0_i32 = arith.constant 0 : i32
    %c0_i32_0 = arith.constant 0 : i32
    return %arg0, %c0_i32 : i32, i32
  }
}

</mosaic_0001>

<llo_original>
// kernel: tpu_custom_call.1
$region0: #{tpu_custom_call.1}
  #allocation0 [shape = 'u32[]', space=smem, size = 0x4, offset = 0x4, fixed_abs, tag = 'smem constant byte address 0x4 - core index']
  #allocation1 [shape = 'u32[144,128]{1,0:T(1,128)}', space=vmem, size = 0x12000, scoped, tag = 'internal scratch']
  %s0 = inlined_call_operand.vmem [shape: f32[4,128], index: 0, kind: input, shape index: {}]
  %s1 = inlined_call_operand.vmem [shape: f32[1,128], index: 1, kind: input, shape index: {}]
  %s2 = inlined_call_operand.vmem [shape: f32[1,128], index: 2, kind: input, shape index: {}]
  %s3 = inlined_call_operand.vmem [shape: f32[128,4], index: 3, kind: input, shape index: {}]
  %s4 = inlined_call_operand.vmem [shape: f32[4,128], index: 4, kind: input, shape index: {}]
  %s5 = inlined_call_operand.hbm [shape: f32[4,128], index: 5, kind: output, shape index: {}]
  %s6 = sld [smem:[#allocation0]]
  $region30: #{tpu_custom_call.1} parent=0
    _
  %s8 = ssub.s32 1, %s6
  %s9 = scalar_select 0, %s8, %s6
  $region1: #{tpu_custom_call.1} parent=0
    #allocation2 [shape = 'u8[2048]{0}', space=vmem, size = 0x800, scoped, tag = 'output window, operand 0, single buffered']
    #allocation3 [shape = 's32[1]{0}', space=sflag, size = 0x4, scoped, tag = 'scoped memory for tpu_custom_call.1']
    %10 = vsyncpa [#allocation3], 0
    // Predicated region
    $region2: #{tpu_custom_call.1} parent=1 // pred_check
      _
    $region3: #{tpu_custom_call.1} parent=1 // pred_check_branch
      %12 = sbr.rel (0) target = $region5
    $region4: #{tpu_custom_call.1} parent=1 // pred_region
      _
    $region5: #{tpu_custom_call.1} parent=1 // pred_fallthru
      _
    // Predicated region
    $region6: #{tpu_custom_call.1} parent=1 // pred_check
      _
    $region7: #{tpu_custom_call.1} parent=1 // pred_check_branch
      %14 = sbr.rel (0) target = $region9
    $region8: #{tpu_custom_call.1} parent=1 // pred_region
      _
    $region9: #{tpu_custom_call.1} parent=1 // pred_fallthru
      _
    // Predicated region
    $region10: #{tpu_custom_call.1} parent=1 // pred_check
      _
    $region11: #{tpu_custom_call.1} parent=1 // pred_check_branch
      %16 = sbr.rel (0) target = $region13
    $region12: #{tpu_custom_call.1} parent=1 // pred_region
      _
    $region13: #{tpu_custom_call.1} parent=1 // pred_fallthru
      _
    // Predicated region
    $region14: #{tpu_custom_call.1} parent=1 // pred_check
      _
    $region15: #{tpu_custom_call.1} parent=1 // pred_check_branch
      %18 = sbr.rel (0) target = $region17
    $region16: #{tpu_custom_call.1} parent=1 // pred_region
      _
    $region17: #{tpu_custom_call.1} parent=1 // pred_fallthru
      _
    // Predicated region
    $region18: #{tpu_custom_call.1} parent=1 // pred_check
      _
    $region19: #{tpu_custom_call.1} parent=1 // pred_check_branch
      %20 = sbr.rel (0) target = $region21
    $region20: #{tpu_custom_call.1} parent=1 // pred_region
      _
    $region21: #{tpu_custom_call.1} parent=1 // pred_fallthru
      _
    %v21 = vld [vmem:[%s0] sm:$0xf]
    %v22 = vld [vmem:[%s1] sm:$0x1]
    %v23 = vld [vmem:[%s2] sm:$0x1]
    %v24 = vld [vmem:[%s3] sm:$0xff]
    %v25 = vld [vmem:[%s3 + $0x8] sm:$0xff]
    %v26 = vld [vmem:[%s3 + $0x10] sm:$0xff]
    %v27 = vld [vmem:[%s3 + $0x18] sm:$0xff]
    %v28 = vld [vmem:[%s3 + $0x20] sm:$0xff]
    %v29 = vld [vmem:[%s3 + $0x28] sm:$0xff]
    %v30 = vld [vmem:[%s3 + $0x30] sm:$0xff]
    %v31 = vld [vmem:[%s3 + $0x38] sm:$0xff]
    %v32 = vld [vmem:[%s3 + $0x40] sm:$0xff]
    %v33 = vld [vmem:[%s3 + $0x48] sm:$0xff]
    %v34 = vld [vmem:[%s3 + $0x50] sm:$0xff]
    %v35 = vld [vmem:[%s3 + $0x58] sm:$0xff]
    %v36 = vld [vmem:[%s3 + $0x60] sm:$0xff]
    %v37 = vld [vmem:[%s3 + $0x68] sm:$0xff]
    %v38 = vld [vmem:[%s3 + $0x70] sm:$0xff]
    %v39 = vld [vmem:[%s3 + $0x78] sm:$0xff]
    %v40 = vld [vmem:[%s4] sm:$0xf]
    %41 = vmatprep.subr.mxu0 0.0
    %42 = vmatpush1.msra.mxu0 %v24
    %43 = vmatprep.subr.mxu0 0.0
    %44 = vmatpush1.msra.mxu0 %v25
    %45 = vmatprep.subr.mxu0 0.0
    %46 = vmatpush1.msra.mxu0 %v26
    %47 = vmatprep.subr.mxu0 0.0
    %48 = vmatpush1.msra.mxu0 %v27
    %49 = vmatprep.subr.mxu0 0.0
    %50 = vmatpush1.msra.mxu0 %v28
    %51 = vmatprep.subr.mxu0 0.0
    %52 = vmatpush1.msra.mxu0 %v29
    %53 = vmatprep.subr.mxu0 0.0
    %54 = vmatpush1.msra.mxu0 %v30
    %55 = vmatprep.subr.mxu0 0.0
    %56 = vmatpush1.msra.mxu0 %v31
    %57 = vmatprep.subr.mxu0 0.0
    %58 = vmatpush1.msra.mxu0 %v32
    %59 = vmatprep.subr.mxu0 0.0
    %60 = vmatpush1.msra.mxu0 %v33
    %61 = vmatprep.subr.mxu0 0.0
    %62 = vmatpush1.msra.mxu0 %v34
    %63 = vmatprep.subr.mxu0 0.0
    %64 = vmatpush1.msra.mxu0 %v35
    %65 = vmatprep.subr.mxu0 0.0
    %66 = vmatpush1.msra.mxu0 %v36
    %67 = vmatprep.subr.mxu0 0.0
    %68 = vmatpush1.msra.mxu0 %v37
    %69 = vmatprep.subr.mxu0 0.0
    %70 = vmatpush1.msra.mxu0 %v38
    %71 = vmatprep.subr.mxu0 0.0
    %72 = vmatpush1.msra.mxu0 %v39
    %73 = vmatprep.subr.mxu0 0.0
    %74 = vmatpush1.msra.mxu0 0.0
    %75 = vmatprep.subr.mxu0 0.0
    %76 = vmatpush1.msra.mxu0 0.0
    %77 = vmatprep.subr.mxu0 0.0
    %78 = vmatpush1.msra.mxu0 0.0
    %79 = vmatprep.subr.mxu0 0.0
    %80 = vmatpush1.msra.mxu0 0.0
    %81 = vmatprep.subr.mxu0 0.0
    %82 = vmatpush1.msra.mxu0 0.0
    %83 = vmatprep.subr.mxu0 0.0
    %84 = vmatpush1.msra.mxu0 0.0
    %85 = vmatprep.subr.mxu0 0.0
    %86 = vmatpush1.msra.mxu0 0.0
    %87 = vmatprep.subr.mxu0 0.0
    %88 = vmatpush1.msra.mxu0 0.0
    %89 = vmatprep.subr.mxu0 0.0
    %90 = vmatpush1.msra.mxu0 0.0
    %91 = vmatprep.subr.mxu0 0.0
    %92 = vmatpush1.msra.mxu0 0.0
    %93 = vmatprep.subr.mxu0 0.0
    %94 = vmatpush1.msra.mxu0 0.0
    %95 = vmatprep.subr.mxu0 0.0
    %96 = vmatpush1.msra.mxu0 0.0
    %97 = vmatprep.subr.mxu0 0.0
    %98 = vmatpush1.msra.mxu0 0.0
    %99 = vmatprep.subr.mxu0 0.0
    %100 = vmatpush1.msra.mxu0 0.0
    %101 = vmatprep.subr.mxu0 0.0
    %102 = vmatpush1.msra.mxu0 0.0
    %103 = vmatprep.subr.mxu0 0.0
    %104 = vmatpush1.msra.mxu0 0.0
    %105 = vmatprep.mubr.f32.mxu0 0.0
    %106 = vmatmul.mubr.f32.gmra.mrb[0].mxu0 %v21
    %v107 = vpop.f32.mrb[0].mxu0
    %v108 = vadd.f32 0.0, %v107
    %v109 = vpop.f32.mrb[0].mxu0
    %110 = vdwg.mxu0
    %v111 = vmul.f32 %v108, 0.03125
    %vm112 = vcmask 31744
    %v114 = vsel %vm112, %v111, 0
    %vm116 = vcmask 1043456
    %v118 = vsel %vm116, %v40, 0
    %120 = vmatprep.subr.mxu0 0.0
    %121 = vmatpush1.msra.mxu0 %v118
    %122 = vmatprep.subr.mxu0 0.0
    %123 = vmatpush1.msra.mxu0 0.0
    %124 = vmatprep.subr.mxu0 0.0
    %125 = vmatpush1.msra.mxu0 0.0
    %126 = vmatprep.subr.mxu0 0.0
    %127 = vmatpush1.msra.mxu0 0.0
    %128 = vmatprep.subr.mxu0 0.0
    %129 = vmatpush1.msra.mxu0 0.0
    %130 = vmatprep.subr.mxu0 0.0
    %131 = vmatpush1.msra.mxu0 0.0
    %132 = vmatprep.subr.mxu0 0.0
    %133 = vmatpush1.msra.mxu0 0.0
    %134 = vmatprep.subr.mxu0 0.0
    %135 = vmatpush1.msra.mxu0 0.0
    %136 = vmatprep.subr.mxu0 0.0
    %137 = vmatpush1.msra.mxu0 0.0
    %138 = vmatprep.subr.mxu0 0.0
    %139 = vmatpush1.msra.mxu0 0.0
    %140 = vmatprep.subr.mxu0 0.0
    %141 = vmatpush1.msra.mxu0 0.0
    %142 = vmatprep.subr.mxu0 0.0
    %143 = vmatpush1.msra.mxu0 0.0
    %144 = vmatprep.subr.mxu0 0.0
    %145 = vmatpush1.msra.mxu0 0.0
    %146 = vmatprep.subr.mxu0 0.0
    %147 = vmatpush1.msra.mxu0 0.0
    %148 = vmatprep.subr.mxu0 0.0
    %149 = vmatpush1.msra.mxu0 0.0
    %150 = vmatprep.subr.mxu0 0.0
    %151 = vmatpush1.msra.mxu0 0.0
    %152 = vmatprep.subr.mxu0 0.0
    %153 = vmatpush1.msra.mxu0 0.0
    %154 = vmatprep.subr.mxu0 0.0
    %155 = vmatpush1.msra.mxu0 0.0
    %156 = vmatprep.subr.mxu0 0.0
    %157 = vmatpush1.msra.mxu0 0.0
    %158 = vmatprep.subr.mxu0 0.0
    %159 = vmatpush1.msra.mxu0 0.0
    %160 = vmatprep.subr.mxu0 0.0
    %161 = vmatpush1.msra.mxu0 0.0
    %162 = vmatprep.subr.mxu0 0.0
    %163 = vmatpush1.msra.mxu0 0.0
    %164 = vmatprep.subr.mxu0 0.0
    %165 = vmatpush1.msra.mxu0 0.0
    %166 = vmatprep.subr.mxu0 0.0
    %167 = vmatpush1.msra.mxu0 0.0
    %168 = vmatprep.subr.mxu0 0.0
    %169 = vmatpush1.msra.mxu0 0.0
    %170 = vmatprep.subr.mxu0 0.0
    %171 = vmatpush1.msra.mxu0 0.0
    %172 = vmatprep.subr.mxu0 0.0
    %173 = vmatpush1.msra.mxu0 0.0
    %174 = vmatprep.subr.mxu0 0.0
    %175 = vmatpush1.msra.mxu0 0.0
    %176 = vmatprep.subr.mxu0 0.0
    %177 = vmatpush1.msra.mxu0 0.0
    %178 = vmatprep.subr.mxu0 0.0
    %179 = vmatpush1.msra.mxu0 0.0
    %180 = vmatprep.subr.mxu0 0.0
    %181 = vmatpush1.msra.mxu0 0.0
    %182 = vmatprep.subr.mxu0 0.0
    %183 = vmatpush1.msra.mxu0 0.0
    %184 = vmatprep.mubr.f32.mxu0 0.0
    %185 = vmatmul.mubr.f32.gmra.mrb[0].mxu0 %v114
    %v186 = vpop.f32.mrb[0].mxu0
    %v187 = vadd.f32 0.0, %v186
    %v188 = vpop.f32.mrb[0].mxu0
    %189 = vdwg.mxu0
    %v190 = vsub.f32 %v21, %v187
    %v191 = vmul.f32 %v190, %v190
    %192 = vmatprep.subr.mxu0 0.0
    %193 = vmatpush1.msra.mxu0 %v24
    %194 = vmatprep.subr.mxu0 0.0
    %195 = vmatpush1.msra.mxu0 %v25
    %196 = vmatprep.subr.mxu0 0.0
    %197 = vmatpush1.msra.mxu0 %v26
    %198 = vmatprep.subr.mxu0 0.0
    %199 = vmatpush1.msra.mxu0 %v27
    %200 = vmatprep.subr.mxu0 0.0
    %201 = vmatpush1.msra.mxu0 %v28
    %202 = vmatprep.subr.mxu0 0.0
    %203 = vmatpush1.msra.mxu0 %v29
    %204 = vmatprep.subr.mxu0 0.0
    %205 = vmatpush1.msra.mxu0 %v30
    %206 = vmatprep.subr.mxu0 0.0
    %207 = vmatpush1.msra.mxu0 %v31
    %208 = vmatprep.subr.mxu0 0.0
    %209 = vmatpush1.msra.mxu0 %v32
    %210 = vmatprep.subr.mxu0 0.0
    %211 = vmatpush1.msra.mxu0 %v33
    %212 = vmatprep.subr.mxu0 0.0
    %213 = vmatpush1.msra.mxu0 %v34
    %214 = vmatprep.subr.mxu0 0.0
    %215 = vmatpush1.msra.mxu0 %v35
    %216 = vmatprep.subr.mxu0 0.0
    %217 = vmatpush1.msra.mxu0 %v36
    %218 = vmatprep.subr.mxu0 0.0
    %219 = vmatpush1.msra.mxu0 %v37
    %220 = vmatprep.subr.mxu0 0.0
    %221 = vmatpush1.msra.mxu0 %v38
    %222 = vmatprep.subr.mxu0 0.0
    %223 = vmatpush1.msra.mxu0 %v39
    %224 = vmatprep.subr.mxu0 0.0
    %225 = vmatpush1.msra.mxu0 0.0
    %226 = vmatprep.subr.mxu0 0.0
    %227 = vmatpush1.msra.mxu0 0.0
    %228 = vmatprep.subr.mxu0 0.0
    %229 = vmatpush1.msra.mxu0 0.0
    %230 = vmatprep.subr.mxu0 0.0
    %231 = vmatpush1.msra.mxu0 0.0
    %232 = vmatprep.subr.mxu0 0.0
    %233 = vmatpush1.msra.mxu0 0.0
    %234 = vmatprep.subr.mxu0 0.0
    %235 = vmatpush1.msra.mxu0 0.0
    %236 = vmatprep.subr.mxu0 0.0
    %237 = vmatpush1.msra.mxu0 0.0
    %238 = vmatprep.subr.mxu0 0.0
    %239 = vmatpush1.msra.mxu0 0.0
    %240 = vmatprep.subr.mxu0 0.0
    %241 = vmatpush1.msra.mxu0 0.0
    %242 = vmatprep.subr.mxu0 0.0
    %243 = vmatpush1.msra.mxu0 0.0
    %244 = vmatprep.subr.mxu0 0.0
    %245 = vmatpush1.msra.mxu0 0.0
    %246 = vmatprep.subr.mxu0 0.0
    %247 = vmatpush1.msra.mxu0 0.0
    %248 = vmatprep.subr.mxu0 0.0
    %249 = vmatpush1.msra.mxu0 0.0
    %250 = vmatprep.subr.mxu0 0.0
    %251 = vmatpush1.msra.mxu0 0.0
    %252 = vmatprep.subr.mxu0 0.0
    %253 = vmatpush1.msra.mxu0 0.0
    %254 = vmatprep.subr.mxu0 0.0
    %255 = vmatpush1.msra.mxu0 0.0
    %256 = vmatprep.mubr.f32.mxu0 0.0
    %257 = vmatmul.mubr.f32.gmra.mrb[0].mxu0 %v191
    %v258 = vpop.f32.mrb[0].mxu0
    %v259 = vadd.f32 0.0, %v258
    %v260 = vpop.f32.mrb[0].mxu0
    %261 = vdwg.mxu0
    %v262 = vmul.f32 %v259, 0.032258064
    %v263 = vrsqrt.pop %v262
    %v264 = vmul.f32 %v262, %v263
    %vm265 = vcmp.eq.f32.partialorder %v262, inf
    %v266 = vsel %vm265, %v262, %v264
    %vm267 = vcmp.eq.f32.partialorder %v262, 0.0
    %v268 = vand.u32 %v262, 2147483648
    %v269 = vsel %vm267, %v268, %v266
    %v270 = vadd.f32 %v269, 1e-06
    %v271 = vrcp.pop %v270
    %v272 = vmul.f32 1.0, %v271
    %v274 = vsel %vm112, %v272, 0
    %276 = vmatprep.subr.mxu0 0.0
    %277 = vmatpush1.msra.mxu0 %v118
    %278 = vmatprep.subr.mxu0 0.0
    %279 = vmatpush1.msra.mxu0 0.0
    %280 = vmatprep.subr.mxu0 0.0
    %281 = vmatpush1.msra.mxu0 0.0
    %282 = vmatprep.subr.mxu0 0.0
    %283 = vmatpush1.msra.mxu0 0.0
    %284 = vmatprep.subr.mxu0 0.0
    %285 = vmatpush1.msra.mxu0 0.0
    %286 = vmatprep.subr.mxu0 0.0
    %287 = vmatpush1.msra.mxu0 0.0
    %288 = vmatprep.subr.mxu0 0.0
    %289 = vmatpush1.msra.mxu0 0.0
    %290 = vmatprep.subr.mxu0 0.0
    %291 = vmatpush1.msra.mxu0 0.0
    %292 = vmatprep.subr.mxu0 0.0
    %293 = vmatpush1.msra.mxu0 0.0
    %294 = vmatprep.subr.mxu0 0.0
    %295 = vmatpush1.msra.mxu0 0.0
    %296 = vmatprep.subr.mxu0 0.0
    %297 = vmatpush1.msra.mxu0 0.0
    %298 = vmatprep.subr.mxu0 0.0
    %299 = vmatpush1.msra.mxu0 0.0
    %300 = vmatprep.subr.mxu0 0.0
    %301 = vmatpush1.msra.mxu0 0.0
    %302 = vmatprep.subr.mxu0 0.0
    %303 = vmatpush1.msra.mxu0 0.0
    %304 = vmatprep.subr.mxu0 0.0
    %305 = vmatpush1.msra.mxu0 0.0
    %306 = vmatprep.subr.mxu0 0.0
    %307 = vmatpush1.msra.mxu0 0.0
    %308 = vmatprep.subr.mxu0 0.0
    %309 = vmatpush1.msra.mxu0 0.0
    %310 = vmatprep.subr.mxu0 0.0
    %311 = vmatpush1.msra.mxu0 0.0
    %312 = vmatprep.subr.mxu0 0.0
    %313 = vmatpush1.msra.mxu0 0.0
    %314 = vmatprep.subr.mxu0 0.0
    %315 = vmatpush1.msra.mxu0 0.0
    %316 = vmatprep.subr.mxu0 0.0
    %317 = vmatpush1.msra.mxu0 0.0
    %318 = vmatprep.subr.mxu0 0.0
    %319 = vmatpush1.msra.mxu0 0.0
    %320 = vmatprep.subr.mxu0 0.0
    %321 = vmatpush1.msra.mxu0 0.0
    %322 = vmatprep.subr.mxu0 0.0
    %323 = vmatpush1.msra.mxu0 0.0
    %324 = vmatprep.subr.mxu0 0.0
    %325 = vmatpush1.msra.mxu0 0.0
    %326 = vmatprep.subr.mxu0 0.0
    %327 = vmatpush1.msra.mxu0 0.0
    %328 = vmatprep.subr.mxu0 0.0
    %329 = vmatpush1.msra.mxu0 0.0
    %330 = vmatprep.subr.mxu0 0.0
    %331 = vmatpush1.msra.mxu0 0.0
    %332 = vmatprep.subr.mxu0 0.0
    %333 = vmatpush1.msra.mxu0 0.0
    %334 = vmatprep.subr.mxu0 0.0
    %335 = vmatpush1.msra.mxu0 0.0
    %336 = vmatprep.subr.mxu0 0.0
    %337 = vmatpush1.msra.mxu0 0.0
    %338 = vmatprep.subr.mxu0 0.0
    %339 = vmatpush1.msra.mxu0 0.0
    %340 = vmatprep.mubr.f32.mxu0 0.0
    %341 = vmatmul.mubr.f32.gmra.mrb[0].mxu0 %v274
    %v342 = vpop.f32.mrb[0].mxu0
    %v343 = vadd.f32 0.0, %v342
    %v344 = vpop.f32.mrb[0].mxu0
    %345 = vdwg.mxu0
    %v346 = vmul.f32 %v190, %v343
    %v348 = vlaneseq
    %v349 = vshrl.u32 %v348, 7
    %v350 = vsub.s32 0, %v349
    %v351 = vrot.slane %v22, %v350
    %v353 = vmul.f32 %v346, %v351
    %v355 = vlaneseq
    %v356 = vshrl.u32 %v355, 7
    %v357 = vsub.s32 0, %v356
    %v358 = vrot.slane %v23, %v357
    %v360 = vadd.f32 %v353, %v358
    %361 = vst [vmem:[#allocation2] sm:$0xf] %v360
    // Predicated region
    $region22: #{tpu_custom_call.1} parent=1 // pred_check
      _
    $region23: #{tpu_custom_call.1} parent=1 // pred_check_branch
      %363 = sbr.rel (0) target = $region25
    $region24: #{tpu_custom_call.1} parent=1 // pred_region
      %s365 = ssub.s32 64, 64
      %366 = vsyncadd [#allocation3], %s365
      %s368 = sshll.u32 [#allocation2], 4
      %s369 = int_to_ptr.vmem [resolvable:$true] %s368
      %371 = dma.vmem_to_hbm [thread:$0]  %s369, 64, %s5, [#allocation3]
    $region25: #{tpu_custom_call.1} parent=1 // pred_fallthru
      _
    // Predicated region
    $region26: #{tpu_custom_call.1} parent=1 // pred_check
      _
    $region27: #{tpu_custom_call.1} parent=1 // pred_check_branch
      %373 = sbr.rel (0) target = $region29
    $region28: #{tpu_custom_call.1} parent=1 // pred_region
      %374 = dma.done [#allocation3], 64
    $region29: #{tpu_custom_call.1} parent=1 // pred_fallthru
      _
    %375 = vsyncpa [#allocation3], 1

</llo_original>
